<compile_context>
chip_gen: v7x
topology: tpu7x:2x2x1
jax: 0.10.0
libtpu: 0.0.40
codegen_flags: <defaults>
</compile_context>

<pallas_src>
import functools

import jax
import jax.numpy as jnp
from jax.experimental import pallas as pl
from jax.experimental.pallas import tpu as pltpu

_LANES = 128
_PAD_LOGIT = -1e4            # exp(-|pad|) == 0 -> zero contribution to all sums
_BLOCK_ELEMS = 512 * 1024    # ~2 MiB f32-equivalent per input per grid step


def _bce_dice_partial_kernel(x_ref, t_ref, out_ref, *, rows_total, tile_rows,
                             grid_d_per, needs_mask):
    """Accumulate per-sample partial sums for BCE-with-logits + Dice.

    x_ref / t_ref : (b_tile, tile_rows, 128) tile of flattened samples.
    out_ref       : (4, b_tile, 8, 128) per-sample vector accumulators
                    [bce_sum, sum(sigmoid*t), sum(sigmoid), sum(t)].
    """
    j = pl.program_id(2)  # innermost ("arbitrary") reduction axis

    @pl.when(j == 0)
    def _():
        out_ref[...] = jnp.zeros_like(out_ref)

    x = x_ref[...].astype(jnp.float32)   # (b_tile, tile_rows, 128)
    t = t_ref[...].astype(jnp.float32)

    # Shared transcendental: e = exp(-|x|) feeds both the stable BCE log term
    # and the sigmoid (exact rewrite).
    e = jnp.exp(-jnp.abs(x))
    bce = jnp.maximum(x, 0.0) - x * t + jnp.log1p(e)
    s = jnp.where(x >= 0.0, 1.0, e) / (1.0 + e)   # == sigmoid(x), exact
    st = s * t

    if needs_mask:
        # Mask rows beyond the true per-sample row count (partial last D tile
        # and/or duplicated clamped tiles from the core split).
        c = pl.program_id(1)
        dtile = c * grid_d_per + j
        row_ids = jax.lax.broadcasted_iota(jnp.int32, (1, tile_rows, 1), 1)
        valid = (dtile * tile_rows + row_ids) < rows_total
        zero = jnp.float32(0.0)
        bce = jnp.where(valid, bce, zero)
        st = jnp.where(valid, st, zero)
        s = jnp.where(valid, s, zero)
        t = jnp.where(valid, t, zero)

    b = x.shape[0]

    def vacc(v):
        # (b_tile, r, 128) -> (b_tile, 8, 128): pure sublane-group VPU adds.
        r = v.shape[1]
        pad = (-r) % 8
        if pad:  # only for tiny full-slab tiles (r < 16)
            v = jnp.concatenate(
                [v, jnp.zeros((b, pad, _LANES), v.dtype)], axis=1)
        return v.reshape(b, (r + pad) // 8, 8, _LANES).sum(axis=1)

    out_ref[0] += vacc(bce)
    out_ref[1] += vacc(st)
    out_ref[2] += vacc(s)
    out_ref[3] += vacc(t)


def bce_dice_loss(logits, target):
    """Pallas implementation of BCEDiceLoss.forward (NCHW or any N-leading shape)."""
    assert logits.shape == target.shape
    n = logits.shape[0]
    x = logits.reshape(n, -1)        # free, row-major view
    t = target.reshape(n, -1)
    d = x.shape[1]                   # true per-sample element count

    itemsizes = (jnp.dtype(logits.dtype).itemsize, jnp.dtype(target.dtype).itemsize)
    sub_mult = max(8, 32 // min(itemsizes))   # sublane multiple for packed dtypes

    # Lane padding only when d is not already 128-aligned (uncommon); pad only
    # to the next 128 boundary, never to a full tile.
    pad = (-d) % _LANES
    if pad:
        # TODO(synk): a fully copy-free ragged-tail path needs manual DMA; this
        # minimal pad still copies the tensor once for unaligned d.
        x = jnp.concatenate(
            [x, jnp.full((n, pad), _PAD_LOGIT, dtype=x.dtype)], axis=1)
        t = jnp.concatenate([t, jnp.zeros((n, pad), dtype=t.dtype)], axis=1)
    rows = (d + pad) // _LANES
    x = x.reshape(n, rows, _LANES)   # free reshape (no copy) in the aligned case
    t = t.reshape(n, rows, _LANES)

    # --- Tiling: bound the per-step block to ~2 MiB f32-equivalent per input ---
    slab_elems = rows * _LANES
    if slab_elems > _BLOCK_ELEMS:
        b_tile = 1
        tile_rows = max(sub_mult, (_BLOCK_ELEMS // _LANES) // sub_mult * sub_mult)
        tile_rows = min(tile_rows, rows)
    else:
        tile_rows = rows             # whole sample per step; block samples instead
        b_tile = 1
        for cand in range(n, 0, -1):
            if n % cand == 0 and cand * slab_elems <= _BLOCK_ELEMS:
                b_tile = cand
                break

    n_blocks = n // b_tile
    grid_d_total = -(-rows // tile_rows)

    # Split the reduction across a second "parallel" axis when there is only a
    # single batch block (keeps both v7x TensorCores busy for N == 1).
    n_split = 2 if (n_blocks == 1 and grid_d_total >= 2) else 1
    grid_d_per = -(-grid_d_total // n_split)

    needs_mask = (rows % tile_rows != 0) or (n_split * grid_d_per != grid_d_total)

    def in_map(i, c, j):
        dt = c * grid_d_per + j
        if needs_mask:
            dt = jnp.minimum(dt, grid_d_total - 1)   # duplicates get fully masked
        return (i, dt, 0)

    def out_map(i, c, j):
        return (0, c * n_blocks + i, 0, 0)

    kernel = functools.partial(
        _bce_dice_partial_kernel, rows_total=rows, tile_rows=tile_rows,
        grid_d_per=grid_d_per, needs_mask=needs_mask)

    partials = pl.pallas_call(
        kernel,
        out_shape=jax.ShapeDtypeStruct((4, n_split * n, 8, _LANES), jnp.float32),
        grid_spec=pltpu.PrefetchScalarGridSpec(
            num_scalar_prefetch=0,
            grid=(n_blocks, n_split, grid_d_per),     # reduction axis last
            in_specs=[
                pl.BlockSpec((b_tile, tile_rows, _LANES), in_map),
                pl.BlockSpec((b_tile, tile_rows, _LANES), in_map),
            ],
            out_specs=pl.BlockSpec((4, b_tile, 8, _LANES), out_map),
        ),
        compiler_params=pltpu.CompilerParams(
            dimension_semantics=("parallel", "parallel", "arbitrary"),
            vmem_limit_bytes=32 * 1024 * 1024,
        ),
    )(x, t)

    # Tiny O(N) scalar combine in plain JAX.
    per = jnp.sum(partials, axis=(2, 3)).reshape(4, n_split, n).sum(axis=1)  # (4, N)
    bce_mean = jnp.sum(per[0]) / jnp.float32(n * d)
    smooth = jnp.float32(1e-5)
    dice = (2.0 * per[1] + smooth) / (per[2] + per[3] + smooth)
    dice_loss = 1.0 - jnp.sum(dice) / jnp.float32(n)
    return 0.5 * bce_mean + dice_loss


def _reference(logits, target):
    """Pure-JAX reference mirroring the PyTorch module."""
    x = logits.astype(jnp.float32)
    t = target.astype(jnp.float32)
    bce = jnp.mean(jnp.maximum(x, 0.0) - x * t + jnp.log1p(jnp.exp(-jnp.abs(x))))
    smooth = 1e-5
    n = x.shape[0]
    s = jax.nn.sigmoid(x).reshape(n, -1)
    tf = t.reshape(n, -1)
    inter = (s * tf).sum(1)
    dice = (2.0 * inter + smooth) / (s.sum(1) + tf.sum(1) + smooth)
    return 0.5 * bce + (1.0 - dice.sum() / n)


if __name__ == "__main__":
    key = jax.random.PRNGKey(0)
    k1, k2 = jax.random.split(key)
    N, C, H, W = 2, 4, 16, 16
    logits = jax.random.normal(k1, (N, C, H, W), dtype=jnp.float32)
    target = jax.random.bernoulli(k2, p=0.3, shape=(N, C, H, W)).astype(jnp.float32)

    loss = jax.block_until_ready(bce_dice_loss(logits, target))
    ref = jax.block_until_ready(_reference(logits, target))
    assert jnp.allclose(loss, ref, rtol=1e-5, atol=1e-5), (loss, ref)
    print("KERNEL_OK")
</pallas_src>

<mosaic_0001>
module attributes {stable_mosaic.version = 11 : i64} {
  func.func @_bce_dice_partial_kernel(%arg0: i32, %arg1: i32, %arg2: i32, %arg3: memref<2x8x128xf32, #tpu.memory_space<vmem>>, %arg4: memref<2x8x128xf32, #tpu.memory_space<vmem>>, %arg5: memref<4x2x8x128xf32, #tpu.memory_space<vmem>>) attributes {dimension_semantics = [#tpu.dimension_semantics<parallel>, #tpu.dimension_semantics<parallel>, #tpu.dimension_semantics<arbitrary>], iteration_bounds = array<i64: 1, 1, 1>, scalar_prefetch = 0 : i64, scratch_operands = 0 : i64, tpu.core_type = #tpu.core_type<tc>, window_params = [{transform_indices = @transform_0, window_bounds = array<i64: 2, 8, 128>}, {transform_indices = @transform_1, window_bounds = array<i64: 2, 8, 128>}, {transform_indices = @transform_2, window_bounds = array<i64: 4, 2, 8, 128>}]} {
    %c0_i32 = arith.constant 0 : i32
    %0 = arith.cmpi eq, %arg2, %c0_i32 : i32
    %1 = arith.extui %0 : i1 to i32
    %c0_i32_0 = arith.constant 0 : i32
    %2 = arith.cmpi ne, %1, %c0_i32_0 : i32
    scf.if %2 {
      %cst_43 = arith.constant 0.000000e+00 : f32
      %55 = vector.broadcast %cst_43 : f32 to vector<4x2x8x128xf32>
      %c0_44 = arith.constant 0 : index
      %c0_45 = arith.constant 0 : index
      %c0_46 = arith.constant 0 : index
      %c0_47 = arith.constant 0 : index
      %56 = vector.load %arg5[%c0_44, %c0_45, %c0_46, %c0_47] : memref<4x2x8x128xf32, #tpu.memory_space<vmem>>, vector<4x2x8x128xf32>
      tpu.vector_store %arg5[%c0_44, %c0_45, %c0_46, %c0_47], %55 {strides = array<i32>} : memref<4x2x8x128xf32, #tpu.memory_space<vmem>>, vector<4x2x8x128xf32>,
    } else {
    }
    %c0 = arith.constant 0 : index
    %c0_1 = arith.constant 0 : index
    %c0_2 = arith.constant 0 : index
    %3 = vector.load %arg3[%c0, %c0_1, %c0_2] : memref<2x8x128xf32, #tpu.memory_space<vmem>>, vector<2x8x128xf32>
    %c0_3 = arith.constant 0 : index
    %c0_4 = arith.constant 0 : index
    %c0_5 = arith.constant 0 : index
    %4 = vector.load %arg4[%c0_3, %c0_4, %c0_5] : memref<2x8x128xf32, #tpu.memory_space<vmem>>, vector<2x8x128xf32>
    %5 = math.absf %3 : vector<2x8x128xf32>
    %cst = arith.constant 0.000000e+00 : f32
    %6 = vector.broadcast %cst : f32 to vector<2x8x128xf32>
    %7 = arith.subf %6, %5 : vector<2x8x128xf32>
    %8 = math.exp %7 : vector<2x8x128xf32>
    %cst_6 = arith.constant 0.000000e+00 : f32
    %9 = vector.broadcast %cst_6 : f32 to vector<2x8x128xf32>
    %10 = arith.maximumf %3, %9 : vector<2x8x128xf32>
    %11 = arith.mulf %3, %4 : vector<2x8x128xf32>
    %12 = arith.subf %10, %11 : vector<2x8x128xf32>
    %13 = math.log1p %8 : vector<2x8x128xf32>
    %14 = arith.addf %12, %13 : vector<2x8x128xf32>
    %cst_7 = arith.constant 0.000000e+00 : f32
    %15 = vector.broadcast %cst_7 : f32 to vector<2x8x128xf32>
    %16 = arith.cmpf oge, %3, %15 : vector<2x8x128xf32>
    %cst_8 = arith.constant 1.000000e+00 : f32
    %17 = vector.broadcast %cst_8 : f32 to vector<2x8x128xf32>
    %18 = arith.select %16, %17, %8 : vector<2x8x128xi1>, vector<2x8x128xf32>
    %cst_9 = arith.constant 1.000000e+00 : f32
    %19 = vector.broadcast %cst_9 : f32 to vector<2x8x128xf32>
    %20 = arith.addf %19, %8 : vector<2x8x128xf32>
    %21 = arith.divf %18, %20 : vector<2x8x128xf32>
    %22 = arith.mulf %21, %4 : vector<2x8x128xf32>
    %c0_10 = arith.constant 0 : index
    %c0_11 = arith.constant 0 : index
    %c0_12 = arith.constant 0 : index
    %c0_13 = arith.constant 0 : index
    %23 = vector.load %arg5[%c0_10, %c0_11, %c0_12, %c0_13] : memref<4x2x8x128xf32, #tpu.memory_space<vmem>>, vector<1x2x8x128xf32>
    %24 = vector.shape_cast %23 : vector<1x2x8x128xf32> to vector<2x8x128xf32>
    %25 = vector.shape_cast %14 : vector<2x8x128xf32> to vector<2x1x8x128xf32>
    %cst_14 = arith.constant dense<0.000000e+00> : vector<2x8x128xf32>
    %26 = vector.multi_reduction <add>, %25, %cst_14 [1] : vector<2x1x8x128xf32> to vector<2x8x128xf32>
    %27 = arith.addf %24, %26 : vector<2x8x128xf32>
    %c0_15 = arith.constant 0 : index
    %c0_16 = arith.constant 0 : index
    %c0_17 = arith.constant 0 : index
    %c0_18 = arith.constant 0 : index
    %28 = vector.load %arg5[%c0_15, %c0_16, %c0_17, %c0_18] : memref<4x2x8x128xf32, #tpu.memory_space<vmem>>, vector<1x2x8x128xf32>
    %29 = vector.shape_cast %28 : vector<1x2x8x128xf32> to vector<2x8x128xf32>
    %30 = vector.shape_cast %27 : vector<2x8x128xf32> to vector<1x2x8x128xf32>
    tpu.vector_store %arg5[%c0_15, %c0_16, %c0_17, %c0_18], %30 {strides = array<i32>} : memref<4x2x8x128xf32, #tpu.memory_space<vmem>>, vector<1x2x8x128xf32>,
    %c1 = arith.constant 1 : index
    %c0_19 = arith.constant 0 : index
    %c0_20 = arith.constant 0 : index
    %c0_21 = arith.constant 0 : index
    %31 = vector.load %arg5[%c1, %c0_19, %c0_20, %c0_21] : memref<4x2x8x128xf32, #tpu.memory_space<vmem>>, vector<1x2x8x128xf32>
    %32 = vector.shape_cast %31 : vector<1x2x8x128xf32> to vector<2x8x128xf32>
    %33 = vector.shape_cast %22 : vector<2x8x128xf32> to vector<2x1x8x128xf32>
    %cst_22 = arith.constant dense<0.000000e+00> : vector<2x8x128xf32>
    %34 = vector.multi_reduction <add>, %33, %cst_22 [1] : vector<2x1x8x128xf32> to vector<2x8x128xf32>
    %35 = arith.addf %32, %34 : vector<2x8x128xf32>
    %c1_23 = arith.constant 1 : index
    %c0_24 = arith.constant 0 : index
    %c0_25 = arith.constant 0 : index
    %c0_26 = arith.constant 0 : index
    %36 = vector.load %arg5[%c1_23, %c0_24, %c0_25, %c0_26] : memref<4x2x8x128xf32, #tpu.memory_space<vmem>>, vector<1x2x8x128xf32>
    %37 = vector.shape_cast %36 : vector<1x2x8x128xf32> to vector<2x8x128xf32>
    %38 = vector.shape_cast %35 : vector<2x8x128xf32> to vector<1x2x8x128xf32>
    tpu.vector_store %arg5[%c1_23, %c0_24, %c0_25, %c0_26], %38 {strides = array<i32>} : memref<4x2x8x128xf32, #tpu.memory_space<vmem>>, vector<1x2x8x128xf32>,
    %c2 = arith.constant 2 : index
    %c0_27 = arith.constant 0 : index
    %c0_28 = arith.constant 0 : index
    %c0_29 = arith.constant 0 : index
    %39 = vector.load %arg5[%c2, %c0_27, %c0_28, %c0_29] : memref<4x2x8x128xf32, #tpu.memory_space<vmem>>, vector<1x2x8x128xf32>
    %40 = vector.shape_cast %39 : vector<1x2x8x128xf32> to vector<2x8x128xf32>
    %41 = vector.shape_cast %21 : vector<2x8x128xf32> to vector<2x1x8x128xf32>
    %cst_30 = arith.constant dense<0.000000e+00> : vector<2x8x128xf32>
    %42 = vector.multi_reduction <add>, %41, %cst_30 [1] : vector<2x1x8x128xf32> to vector<2x8x128xf32>
    %43 = arith.addf %40, %42 : vector<2x8x128xf32>
    %c2_31 = arith.constant 2 : index
    %c0_32 = arith.constant 0 : index
    %c0_33 = arith.constant 0 : index
    %c0_34 = arith.constant 0 : index
    %44 = vector.load %arg5[%c2_31, %c0_32, %c0_33, %c0_34] : memref<4x2x8x128xf32, #tpu.memory_space<vmem>>, vector<1x2x8x128xf32>
    %45 = vector.shape_cast %44 : vector<1x2x8x128xf32> to vector<2x8x128xf32>
    %46 = vector.shape_cast %43 : vector<2x8x128xf32> to vector<1x2x8x128xf32>
    tpu.vector_store %arg5[%c2_31, %c0_32, %c0_33, %c0_34], %46 {strides = array<i32>} : memref<4x2x8x128xf32, #tpu.memory_space<vmem>>, vector<1x2x8x128xf32>,
    %c3 = arith.constant 3 : index
    %c0_35 = arith.constant 0 : index
    %c0_36 = arith.constant 0 : index
    %c0_37 = arith.constant 0 : index
    %47 = vector.load %arg5[%c3, %c0_35, %c0_36, %c0_37] : memref<4x2x8x128xf32, #tpu.memory_space<vmem>>, vector<1x2x8x128xf32>
    %48 = vector.shape_cast %47 : vector<1x2x8x128xf32> to vector<2x8x128xf32>
    %49 = vector.shape_cast %4 : vector<2x8x128xf32> to vector<2x1x8x128xf32>
    %cst_38 = arith.constant dense<0.000000e+00> : vector<2x8x128xf32>
    %50 = vector.multi_reduction <add>, %49, %cst_38 [1] : vector<2x1x8x128xf32> to vector<2x8x128xf32>
    %51 = arith.addf %48, %50 : vector<2x8x128xf32>
    %c3_39 = arith.constant 3 : index
    %c0_40 = arith.constant 0 : index
    %c0_41 = arith.constant 0 : index
    %c0_42 = arith.constant 0 : index
    %52 = vector.load %arg5[%c3_39, %c0_40, %c0_41, %c0_42] : memref<4x2x8x128xf32, #tpu.memory_space<vmem>>, vector<1x2x8x128xf32>
    %53 = vector.shape_cast %52 : vector<1x2x8x128xf32> to vector<2x8x128xf32>
    %54 = vector.shape_cast %51 : vector<2x8x128xf32> to vector<1x2x8x128xf32>
    tpu.vector_store %arg5[%c3_39, %c0_40, %c0_41, %c0_42], %54 {strides = array<i32>} : memref<4x2x8x128xf32, #tpu.memory_space<vmem>>, vector<1x2x8x128xf32>,
    return
  }
  func.func @transform_0(%arg0: i32, %arg1: i32, %arg2: i32) -> (i32, i32, i32) {
    %c1_i32 = arith.constant 1 : i32
    %0 = arith.muli %arg1, %c1_i32 : i32
    %1 = arith.addi %0, %arg2 : i32
    %c0_i32 = arith.constant 0 : i32
    %c0_i32_0 = arith.constant 0 : i32
    return %arg0, %1, %c0_i32 : i32, i32, i32
  }
  func.func @transform_1(%arg0: i32, %arg1: i32, %arg2: i32) -> (i32, i32, i32) {
    %c1_i32 = arith.constant 1 : i32
    %0 = arith.muli %arg1, %c1_i32 : i32
    %1 = arith.addi %0, %arg2 : i32
    %c0_i32 = arith.constant 0 : i32
    %c0_i32_0 = arith.constant 0 : i32
    return %arg0, %1, %c0_i32 : i32, i32, i32
  }
  func.func @transform_2(%arg0: i32, %arg1: i32, %arg2: i32) -> (i32, i32, i32, i32) {
    %c1_i32 = arith.constant 1 : i32
    %0 = arith.muli %arg1, %c1_i32 : i32
    %1 = arith.addi %0, %arg0 : i32
    %c0_i32 = arith.constant 0 : i32
    %c0_i32_0 = arith.constant 0 : i32
    %c0_i32_1 = arith.constant 0 : i32
    %c0_i32_2 = arith.constant 0 : i32
    return %c0_i32, %1, %c0_i32_0, %c0_i32_1 : i32, i32, i32, i32
  }
}

</mosaic_0001>

<llo_original>
// kernel: tpu_custom_call.1
$region0: #{tpu_custom_call.1}
  #allocation0 [shape = 'u32[]', space=smem, size = 0x4, offset = 0x4, fixed_abs, tag = 'smem constant byte address 0x4 - core index']
  #allocation1 [shape = 'u32[144,128]{1,0:T(1,128)}', space=vmem, size = 0x12000, scoped, tag = 'internal scratch']
  %s0 = inlined_call_operand.hbm [shape: f32[2,8,128], index: 0, kind: input, shape index: {}]
  %s1 = inlined_call_operand.hbm [shape: f32[2,8,128], index: 1, kind: input, shape index: {}]
  %s2 = inlined_call_operand.hbm [shape: f32[4,2,8,128], index: 2, kind: output, shape index: {}]
  %s3 = sld [smem:[#allocation0]]
  $region30: #{tpu_custom_call.1} parent=0
    _
  %s5 = ssub.s32 1, %s3
  %s6 = scalar_select 0, %s5, %s3
  $region1: #{tpu_custom_call.1} parent=0
    #allocation2 [shape = 'u8[8192]{0}', space=vmem, size = 0x2000, scoped, tag = 'input window, operand 0, single buffered']
    #allocation3 [shape = 's32[1]{0}', space=sflag, size = 0x4, scoped, tag = 'scoped memory for tpu_custom_call.1']
    #allocation4 [shape = 's32[1]{0}', space=sflag, size = 0x4, scoped, tag = 'scoped memory for tpu_custom_call.1']
    #allocation5 [shape = 'u8[8192]{0}', space=vmem, size = 0x2000, scoped, tag = 'input window, operand 1, single buffered']
    #allocation6 [shape = 's32[1]{0}', space=sflag, size = 0x4, scoped, tag = 'scoped memory for tpu_custom_call.1']
    #allocation7 [shape = 'u8[32768]{0}', space=vmem, size = 0x8000, scoped, tag = 'output window, operand 0, single buffered']
    %7 = vsyncpa [#allocation3], 0
    %8 = vsyncpa [#allocation6], 0
    %9 = vsyncpa [#allocation4], 0
    // Predicated region
    $region2: #{tpu_custom_call.1} parent=1 // pred_check
      _
    $region3: #{tpu_custom_call.1} parent=1 // pred_check_branch
      %11 = sbr.rel (0) target = $region5
    $region4: #{tpu_custom_call.1} parent=1 // pred_region
      %s12 = sadd.s32 0, 0
      %s14 = ssub.s32 256, 256
      %15 = vsyncadd [#allocation3], %s14
      %s16 = smul.addr %s12, 128
      %s17 = scalar_lea.hbm %s0, %s16
      %s18 = sshll.u32 [#allocation2], 4
      %s19 = int_to_ptr.vmem [resolvable:$true] %s18
      %24 = dma.hbm_to_vmem [thread:$0]  %s17, 256, %s19, [#allocation3], 128, 128, 8
    $region5: #{tpu_custom_call.1} parent=1 // pred_fallthru
      _
    // Predicated region
    $region6: #{tpu_custom_call.1} parent=1 // pred_check
      _
    $region7: #{tpu_custom_call.1} parent=1 // pred_check_branch
      %26 = sbr.rel (0) target = $region9
    $region8: #{tpu_custom_call.1} parent=1 // pred_region
      %s27 = sadd.s32 0, 0
      %s29 = ssub.s32 256, 256
      %30 = vsyncadd [#allocation6], %s29
      %s31 = smul.addr %s27, 128
      %s32 = scalar_lea.hbm %s1, %s31
      %s33 = sshll.u32 [#allocation5], 4
      %s34 = int_to_ptr.vmem [resolvable:$true] %s33
      %39 = dma.hbm_to_vmem [thread:$0]  %s32, 256, %s34, [#allocation6], 128, 128, 8
    $region9: #{tpu_custom_call.1} parent=1 // pred_fallthru
      _
    // Predicated region
    $region10: #{tpu_custom_call.1} parent=1 // pred_check
      _
    $region11: #{tpu_custom_call.1} parent=1 // pred_check_branch
      %41 = sbr.rel (0) target = $region13
    $region12: #{tpu_custom_call.1} parent=1 // pred_region
      %42 = dma.done [#allocation3], 256
    $region13: #{tpu_custom_call.1} parent=1 // pred_fallthru
      _
    // Predicated region
    $region14: #{tpu_custom_call.1} parent=1 // pred_check
      _
    $region15: #{tpu_custom_call.1} parent=1 // pred_check_branch
      %44 = sbr.rel (0) target = $region17
    $region16: #{tpu_custom_call.1} parent=1 // pred_region
      %45 = dma.done [#allocation6], 256
    $region17: #{tpu_custom_call.1} parent=1 // pred_fallthru
      _
    %s46 = sadd.s32 0, 0
    %s47 = sadd.s32 0, 0
    %s48 = sadd.s32 0, 0
    %s49 = smul.u32 2, %s48
    %p50 = scmp.eq.s32.totalorder 0, 0
    // Predicated region
    $region18: #{tpu_custom_call.1} parent=1 // pred_check
      %p51 = pneg %p50
    $region19: #{tpu_custom_call.1} parent=1 // pred_check_branch
      %53 = sbr.rel (%p51) target = $region21
    $region20: #{tpu_custom_call.1} parent=1 // pred_region
      %54 = vst [vmem:[#allocation7] sm:$0xff] 0.0
      %55 = vst [vmem:[#allocation7 + $0x8] sm:$0xff] 0.0
      %56 = vst [vmem:[#allocation7 + $0x10] sm:$0xff] 0.0
      %57 = vst [vmem:[#allocation7 + $0x18] sm:$0xff] 0.0
      %58 = vst [vmem:[#allocation7 + $0x20] sm:$0xff] 0.0
      %59 = vst [vmem:[#allocation7 + $0x28] sm:$0xff] 0.0
      %60 = vst [vmem:[#allocation7 + $0x30] sm:$0xff] 0.0
      %61 = vst [vmem:[#allocation7 + $0x38] sm:$0xff] 0.0
    $region21: #{tpu_custom_call.1} parent=1 // pred_fallthru
      _
    %v62 = vld [vmem:[#allocation2] sm:$0xff]
    %v63 = vld [vmem:[#allocation2 + $0x8] sm:$0xff]
    %v64 = vld [vmem:[#allocation5] sm:$0xff]
    %v65 = vld [vmem:[#allocation5 + $0x8] sm:$0xff]
    %v66 = vand.u32 2147483647, %v62
    %v67 = vand.u32 2147483647, %v63
    %v68 = vsub.f32 0.0, %v66
    %v69 = vsub.f32 0.0, %v67
    %v70 = vmul.f32 %v68, 1.442695
    %v71 = vpow.pop %v70
    %v72 = vmul.f32 %v69, 1.442695
    %v73 = vpow.pop %v72
    %v74 = vmax.f32 %v62, 0.0
    %v75 = vmax.f32 %v63, 0.0
    %v76 = vmul.f32 %v62, %v64
    %v77 = vmul.f32 %v63, %v65
    %v78 = vsub.f32 %v74, %v76
    %v79 = vsub.f32 %v75, %v77
    %v80 = vadd.f32 %v71, 1.0
    %v81 = vlog2.pop %v80
    %v82 = vmul.f32 %v81, 0.6931472
    %v83 = vmul.f32 -0.5, %v71
    %v84 = vadd.f32 %v83, 1.0
    %v85 = vmul.f32 %v84, %v71
    %v86 = vand.u32 2147483647, %v71
    %vm87 = vcmp.lt.f32.partialorder %v86, 0.0004427343
    %v88 = vsel %vm87, %v85, %v82
    %v89 = vadd.f32 %v73, 1.0
    %v90 = vlog2.pop %v89
    %v91 = vmul.f32 %v90, 0.6931472
    %v92 = vmul.f32 -0.5, %v73
    %v93 = vadd.f32 %v92, 1.0
    %v94 = vmul.f32 %v93, %v73
    %v95 = vand.u32 2147483647, %v73
    %vm96 = vcmp.lt.f32.partialorder %v95, 0.0004427343
    %v97 = vsel %vm96, %v94, %v91
    %v98 = vadd.f32 %v78, %v88
    %v99 = vadd.f32 %v79, %v97
    %vm100 = vcmp.ge.f32.partialorder %v62, 0.0
    %vm101 = vcmp.ge.f32.partialorder %v63, 0.0
    %v102 = vsel %vm100, 1.0, %v71
    %v103 = vsel %vm101, 1.0, %v73
    %v104 = vadd.f32 %v71, 1.0
    %v105 = vadd.f32 %v73, 1.0
    %v106 = vrcp.pop %v104
    %v107 = vmul.f32 %v102, %v106
    %v108 = vrcp.pop %v105
    %v109 = vmul.f32 %v103, %v108
    %v110 = vmul.f32 %v107, %v64
    %v111 = vmul.f32 %v109, %v65
    %v112 = vld [vmem:[#allocation7] sm:$0xff]
    %v113 = vld [vmem:[#allocation7 + $0x8] sm:$0xff]
    %v114 = vadd.f32 %v98, 0.0
    %v115 = vadd.f32 %v99, 0.0
    %v116 = vadd.f32 %v112, %v114
    %v117 = vadd.f32 %v113, %v115
    %118 = vst [vmem:[#allocation7] sm:$0xff] %v116
    %119 = vst [vmem:[#allocation7 + $0x8] sm:$0xff] %v117
    %s120 = scalar_lea.vmem [#allocation7], 16
    %v121 = vld [vmem:[%s120] sm:$0xff]
    %v122 = vld [vmem:[%s120 + $0x8] sm:$0xff]
    %v123 = vadd.f32 %v110, 0.0
    %v124 = vadd.f32 %v111, 0.0
    %v125 = vadd.f32 %v121, %v123
    %v126 = vadd.f32 %v122, %v124
    %127 = vst [vmem:[%s120] sm:$0xff] %v125
    %128 = vst [vmem:[%s120 + $0x8] sm:$0xff] %v126
    %s129 = scalar_lea.vmem [#allocation7], 32
    %v130 = vld [vmem:[%s129] sm:$0xff]
    %v131 = vld [vmem:[%s129 + $0x8] sm:$0xff]
    %v132 = vadd.f32 %v107, 0.0
    %v133 = vadd.f32 %v109, 0.0
    %v134 = vadd.f32 %v130, %v132
    %v135 = vadd.f32 %v131, %v133
    %136 = vst [vmem:[%s129] sm:$0xff] %v134
    %137 = vst [vmem:[%s129 + $0x8] sm:$0xff] %v135
    %s138 = scalar_lea.vmem [#allocation7], 48
    %v139 = vld [vmem:[%s138] sm:$0xff]
    %v140 = vld [vmem:[%s138 + $0x8] sm:$0xff]
    %v141 = vadd.f32 %v64, 0.0
    %v142 = vadd.f32 %v65, 0.0
    %v143 = vadd.f32 %v139, %v141
    %v144 = vadd.f32 %v140, %v142
    %145 = vst [vmem:[%s138] sm:$0xff] %v143
    %146 = vst [vmem:[%s138 + $0x8] sm:$0xff] %v144
    // Predicated region
    $region22: #{tpu_custom_call.1} parent=1 // pred_check
      _
    $region23: #{tpu_custom_call.1} parent=1 // pred_check_branch
      %148 = sbr.rel (0) target = $region25
    $region24: #{tpu_custom_call.1} parent=1 // pred_region
      %s149 = sadd.s32 0, 0
      %s150 = smul.u32 2, %s149
      %s152 = ssub.s32 1024, 1024
      %153 = vsyncadd [#allocation4], %s152
      %s154 = smul.addr %s150, 128
      %s155 = scalar_lea.hbm %s2, %s154
      %s156 = sshll.u32 [#allocation7], 4
      %s157 = int_to_ptr.vmem [resolvable:$true] %s156
      %162 = dma.vmem_to_hbm [thread:$0]  %s157, 1024, %s155, [#allocation4], 128, 128, 8
    $region25: #{tpu_custom_call.1} parent=1 // pred_fallthru
      _
    // Predicated region
    $region26: #{tpu_custom_call.1} parent=1 // pred_check
      _
    $region27: #{tpu_custom_call.1} parent=1 // pred_check_branch
      %164 = sbr.rel (0) target = $region29
    $region28: #{tpu_custom_call.1} parent=1 // pred_region
      %165 = dma.done [#allocation4], 1024
    $region29: #{tpu_custom_call.1} parent=1 // pred_fallthru
      _
    %166 = vsyncpa [#allocation3], 1
    %167 = vsyncpa [#allocation6], 1
    %168 = vsyncpa [#allocation4], 1

</llo_original>
